<compile_context>
chip_gen: v5e
topology: v5e:2x2
jax: 0.10.0
libtpu: 0.0.40
codegen_flags: <defaults>
</compile_context>

<pallas_src>
import functools

import jax
import jax.numpy as jnp
import numpy as np
from jax.experimental import pallas as pl
from jax.experimental.pallas import tpu as pltpu


def _round_up(x, m):
    return ((x + m - 1) // m) * m


def hopfield_kernel(w_ref, feat_ref, state_ref, aux_ref, *,
                    input_dim, hidden_dim, all_dim, num_update):
    """Full Hopfield update loop for one batch block.

    w_ref    : (all_pad, all_pad) f32/bf16; symmetrized, zero diagonal, zero
               pad, first input_dim columns zeroed (update mask folded in).
    feat_ref : (bb, all_pad) f32 padded input rows (zero outside input lanes).
    state_ref: (bb, all_pad) f32 out: state_last (output segment binarized).
    aux_ref  : (bb, aux_w) f32 out: lanes [0, num_update) = ||state_j - state_{j-1}||,
               lane num_update = eval-mode L1 loss, remaining lanes 0.
    """
    output_dim = input_dim
    b = 0.5     # a == 1.0 in the reference, so the (1 - a) * state term vanishes.

    feat = feat_ref[...]                                     # (bb, all_pad)
    bb, all_pad = feat.shape
    aux_w = aux_ref.shape[-1]

    aux_iota = jax.lax.broadcasted_iota(jnp.int32, (1, aux_w), 1)

    def step(jj, carry):
        state_old, diff_acc = carry
        sig = jax.nn.sigmoid(state_old * b).astype(w_ref.dtype)   # EUP
        matv = jnp.dot(sig, w_ref[...],                           # MXU, f32 acc
                       preferred_element_type=jnp.float32)
        # Update mask is folded into W's columns and feat is zero outside the
        # clamped input lanes, so the masked update is simply:
        state_new = matv + feat
        d = state_new - state_old
        diff_sq = jnp.sum(d * d, axis=1, keepdims=True)           # (bb, 1)
        diff_acc = diff_acc + diff_sq * (aux_iota == jj).astype(jnp.float32)
        return state_new, diff_acc

    carry = (feat, jnp.zeros((bb, aux_w), jnp.float32))
    if num_update <= 8:
        # Tiny trip count: full unroll (best LLO scheduling visibility).
        for jj in range(num_update):
            carry = step(jj, carry)
    else:
        # Larger trip count: keep vreg pressure flat, small unroll.
        carry = jax.lax.fori_loop(0, num_update, step, carry, unroll=2)
    state_last, diff_sq_acc = carry

    # ---- epilogue (runs once per block) ----
    lane = jax.lax.broadcasted_iota(jnp.int32, (1, all_pad), 1)
    out_lane = (lane >= input_dim + hidden_dim) & (lane < all_dim)
    binarized = jnp.where(state_last >= 0.5, 1.0, 0.0)
    state_ref[...] = jnp.where(out_lane, binarized, state_last)

    # Eval-mode L1 loss: binarized output segment vs. the clamped input
    # segment.  Align input lanes [0, input_dim) with the output lanes via a
    # single XLU lane roll (no unaligned narrow slices / relayouts).
    out_maskf = out_lane.astype(jnp.float32)
    feat_at_out = pltpu.roll(feat, input_dim + hidden_dim, 1)
    l1 = jnp.sum(jnp.abs(binarized - feat_at_out) * out_maskf,
                 axis=1, keepdims=True) * (1.0 / output_dim)      # (bb, 1)

    # Single lane-dense store for diff norms + loss (one sqrt, one store).
    aux_ref[...] = (jnp.sqrt(diff_sq_acc)
                    + l1 * (aux_iota == num_update).astype(jnp.float32))


def hopfield_forward_batched(feat, W, *, input_dim, hidden_dim, num_update,
                             use_bf16_mxu=False):
    """Batched eval-mode forward.  feat: (B, ...) flattening to (B, input_dim).

    Returns (loss (B,), state_last (B, all_dim), diff_norm (B, num_update)).
    """
    output_dim = input_dim
    all_dim = input_dim + hidden_dim + output_dim
    all_pad = _round_up(all_dim, 128)
    aux_w = _round_up(num_update + 1, 128)    # diff norms + loss, lane-dense

    B = feat.shape[0]
    x = feat.reshape(B, -1).astype(jnp.float32)
    assert x.shape[1] == input_dim

    # block_b: multiple of 8 sublanes, capped at 256 (MXU height on v6e/v7x),
    # chosen so the "parallel" batch grid has >=2 steps when B allows
    # (v7x megacore = 2 TensorCores).
    block_b = min(_round_up(-(-B // 2), 8), 256)
    B_pad = _round_up(B, block_b)

    feat_pad = jnp.zeros((B_pad, all_pad), jnp.float32).at[:B, :input_dim].set(x)

    # Symmetrize + zero diagonal + zero pad, then fold the update mask into W
    # by zeroing the first input_dim *columns* (row-vector layout) so the hot
    # loop needs no mask multiply.  Pad rows/columns stay exactly zero, which
    # keeps the padded lanes of the state at exactly zero.
    W = W.astype(jnp.float32)
    W_sym = (W + W.T) * (1.0 - jnp.eye(all_dim, dtype=jnp.float32))
    W_pad = jnp.zeros((all_pad, all_pad), jnp.float32).at[:all_dim, :all_dim].set(W_sym)
    lane = jnp.arange(all_pad)[None, :]
    W_pad = jnp.where(lane >= input_dim, W_pad, 0.0)
    # Optional bf16 MXU operands (f32 accumulation): cast W once here, which
    # also halves its resident VMEM / HBM traffic.
    W_pad = W_pad.astype(jnp.bfloat16 if use_bf16_mxu else jnp.float32)

    kernel = functools.partial(
        hopfield_kernel, input_dim=input_dim, hidden_dim=hidden_dim,
        all_dim=all_dim, num_update=num_update)

    # Explicit VMEM budget: W (double-buffered) + feat/state/aux blocks
    # (double-buffered) + headroom; clamped to [32 MiB, 64 MiB], valid on
    # v5e / v6e / v7x.
    w_item = 2 if use_bf16_mxu else 4
    vmem_est = (2 * all_pad * all_pad * w_item
                + 2 * block_b * all_pad * 4 * 2
                + 2 * block_b * aux_w * 4)
    vmem_limit = int(min(max(vmem_est + (8 << 20), 32 << 20), 64 << 20))

    grid = (B_pad // block_b,)
    state_pad, aux = pl.pallas_call(
        kernel,
        out_shape=(
            jax.ShapeDtypeStruct((B_pad, all_pad), jnp.float32),
            jax.ShapeDtypeStruct((B_pad, aux_w), jnp.float32),
        ),
        grid=grid,
        in_specs=[
            pl.BlockSpec((all_pad, all_pad), lambda i: (0, 0)),    # W resident
            pl.BlockSpec((block_b, all_pad), lambda i: (i, 0)),
        ],
        out_specs=(
            pl.BlockSpec((block_b, all_pad), lambda i: (i, 0)),
            pl.BlockSpec((block_b, aux_w), lambda i: (i, 0)),
        ),
        compiler_params=pltpu.CompilerParams(
            dimension_semantics=("parallel",),
            vmem_limit_bytes=vmem_limit),
    )(W_pad, feat_pad)

    loss = aux[:B, num_update]
    diff = aux[:B, :num_update]
    state = state_pad[:B, :all_dim]
    return loss, state, diff


def hopfield_forward(feat, W, *, input_dim, hidden_dim, num_update,
                     use_bf16_mxu=False):
    """Module-equivalent eval forward. Returns (loss, state_last, diff_norm, None)."""
    assert feat.shape[0] == 1, "set batch size to 1 for simplicity"
    output_dim = input_dim
    all_dim = input_dim + hidden_dim + output_dim
    loss, state, diff = hopfield_forward_batched(
        feat, W, input_dim=input_dim, hidden_dim=hidden_dim,
        num_update=num_update, use_bf16_mxu=use_bf16_mxu)
    # Back to PyTorch column-vector convention.
    return loss[0], state[0].reshape(all_dim, 1), diff[0], None


def hopfield_forward_ref(feat, W, *, input_dim, hidden_dim, num_update):
    """Pure-JAX reference mirroring the PyTorch column-vector code (batch=1)."""
    output_dim = input_dim
    all_dim = input_dim + hidden_dim + output_dim
    x = feat.reshape(-1, 1).astype(jnp.float32)
    f = jnp.pad(x, ((0, hidden_dim + output_dim), (0, 0)))
    mask = jnp.ones_like(f).at[:input_dim].set(0.0)
    Ws = (W.astype(jnp.float32) + W.astype(jnp.float32).T) * \
        (1.0 - jnp.eye(all_dim, dtype=jnp.float32))
    a, b = 1.0, 0.5
    s = f
    diffs = []
    for _ in range(num_update):
        s_new = (1.0 - a) * s + Ws @ jax.nn.sigmoid(s * b)
        s_new = s_new * mask + f * (1.0 - mask)
        diffs.append(jnp.linalg.norm(s_new - s))
        s = s_new
    bin_seg = jnp.where(s[-output_dim:] >= 0.5, 1.0, 0.0)
    s = s.at[-output_dim:].set(bin_seg)
    loss = jnp.mean(jnp.abs(bin_seg - f[:input_dim]))
    return loss, s, jnp.stack(diffs)


if __name__ == "__main__":
    # Small config: input_dim=16, hidden_dim=32 -> all_dim=64, num_update=5.
    input_dim, hidden_dim, num_update = 16, 32, 5
    all_dim = input_dim + hidden_dim + input_dim

    key = jax.random.PRNGKey(0)
    k_w, k_x, k_xb, k_xs = jax.random.split(key, 4)
    W = jax.random.normal(k_w, (all_dim, all_dim), dtype=jnp.float32) * 0.001

    # 1) Module-equivalent path (batch size 1, exact f32 semantics).
    feat = (jax.random.uniform(k_x, (1, input_dim)) > 0.5).astype(jnp.float32)
    loss, state_last, diff_norm, grad = hopfield_forward(
        feat, W, input_dim=input_dim, hidden_dim=hidden_dim,
        num_update=num_update)
    jax.block_until_ready((loss, state_last, diff_norm))
    loss_r, state_r, diff_r = hopfield_forward_ref(
        feat, W, input_dim=input_dim, hidden_dim=hidden_dim,
        num_update=num_update)
    np.testing.assert_allclose(np.asarray(loss), np.asarray(loss_r),
                               rtol=1e-5, atol=1e-5)
    np.testing.assert_allclose(np.asarray(state_last), np.asarray(state_r),
                               rtol=1e-5, atol=1e-5)
    np.testing.assert_allclose(np.asarray(diff_norm), np.asarray(diff_r),
                               rtol=1e-5, atol=1e-5)
    assert grad is None

    # 2) Batched f32 path: B=16 -> block_b=8 -> two "parallel" grid steps
    #    (exercises megacore sharding on v7x; W stays VMEM-resident).
    Bb = 16
    feat_b = (jax.random.uniform(k_xb, (Bb, input_dim)) > 0.5).astype(jnp.float32)
    loss_b, state_b, diff_b = hopfield_forward_batched(
        feat_b, W, input_dim=input_dim, hidden_dim=hidden_dim,
        num_update=num_update)
    jax.block_until_ready((loss_b, state_b, diff_b))
    for i in range(Bb):
        l_r, s_r, d_r = hopfield_forward_ref(
            feat_b[i:i + 1], W, input_dim=input_dim, hidden_dim=hidden_dim,
            num_update=num_update)
        np.testing.assert_allclose(np.asarray(loss_b[i]), np.asarray(l_r),
                                   rtol=1e-5, atol=1e-5)
        np.testing.assert_allclose(np.asarray(state_b[i]),
                                   np.asarray(s_r).reshape(-1),
                                   rtol=1e-5, atol=1e-5)
        np.testing.assert_allclose(np.asarray(diff_b[i]), np.asarray(d_r),
                                   rtol=1e-5, atol=1e-5)

    # 3) bf16-MXU fast path (recommended for v5e/v6e/v7x); loose tolerance
    #    since bf16 error compounds over the fixed-point iterations.
    loss_h, state_h, diff_h = hopfield_forward_batched(
        feat_b, W, input_dim=input_dim, hidden_dim=hidden_dim,
        num_update=num_update, use_bf16_mxu=True)
    jax.block_until_ready((loss_h, state_h, diff_h))
    np.testing.assert_allclose(np.asarray(state_h), np.asarray(state_b),
                               rtol=1e-1, atol=1e-2)
    np.testing.assert_allclose(np.asarray(diff_h), np.asarray(diff_b),
                               rtol=1e-1, atol=1e-2)
    np.testing.assert_allclose(np.asarray(loss_h), np.asarray(loss_b),
                               rtol=1e-1, atol=1e-2)

    # 4) Larger num_update exercises the in-kernel fori_loop(unroll=2) path.
    nu_big = 16
    loss2, state2, diff2, _ = hopfield_forward(
        feat, W, input_dim=input_dim, hidden_dim=hidden_dim, num_update=nu_big)
    jax.block_until_ready((loss2, state2, diff2))
    l2_r, s2_r, d2_r = hopfield_forward_ref(
        feat, W, input_dim=input_dim, hidden_dim=hidden_dim, num_update=nu_big)
    np.testing.assert_allclose(np.asarray(loss2), np.asarray(l2_r),
                               rtol=1e-4, atol=1e-4)
    np.testing.assert_allclose(np.asarray(state2), np.asarray(s2_r),
                               rtol=1e-4, atol=1e-4)
    np.testing.assert_allclose(np.asarray(diff2), np.asarray(d2_r),
                               rtol=1e-4, atol=1e-4)

    # 5) Larger-weight regime so the binarized output segment is non-trivial
    #    (structurally exercises the roll-aligned loss + binarization path);
    #    tolerances chosen to be robust to >=0.5 threshold effects.
    W_big = W * 300.0                      # ~ randn * 0.3
    feat_s = (jax.random.uniform(k_xs, (2, input_dim)) > 0.5).astype(jnp.float32)
    loss_s, state_s, diff_s = hopfield_forward_batched(
        feat_s, W_big, input_dim=input_dim, hidden_dim=hidden_dim,
        num_update=num_update)
    jax.block_until_ready((loss_s, state_s, diff_s))
    for i in range(2):
        l_r, s_r, d_r = hopfield_forward_ref(
            feat_s[i:i + 1], W_big, input_dim=input_dim, hidden_dim=hidden_dim,
            num_update=num_update)
        np.testing.assert_allclose(            # continuous (non-binarized) part
            np.asarray(state_s[i, :input_dim + hidden_dim]),
            np.asarray(s_r[:input_dim + hidden_dim]).reshape(-1),
            rtol=1e-2, atol=5e-3)
        np.testing.assert_allclose(np.asarray(diff_s[i]), np.asarray(d_r),
                                   rtol=1e-2, atol=1e-2)
        np.testing.assert_allclose(np.asarray(loss_s[i]), np.asarray(l_r),
                                   atol=0.08)

    print("KERNEL_OK")
</pallas_src>

<mosaic_0001>
module attributes {stable_mosaic.version = 11 : i64} {
  func.func @hopfield_kernel(%arg0: i32, %arg1: memref<128x128xf32, #tpu.memory_space<vmem>>, %arg2: memref<8x128xf32, #tpu.memory_space<vmem>>, %arg3: memref<8x128xf32, #tpu.memory_space<vmem>>, %arg4: memref<8x128xf32, #tpu.memory_space<vmem>>) attributes {dimension_semantics = [#tpu.dimension_semantics<parallel>], iteration_bounds = array<i64: 1>, scalar_prefetch = 0 : i64, scratch_operands = 0 : i64, tpu.core_type = #tpu.core_type<tc>, window_params = [{pipeline_mode = #tpu.pipeline_mode<synchronous>, transform_indices = @transform_0, window_bounds = array<i64: 128, 128>}, {transform_indices = @transform_1, window_bounds = array<i64: 8, 128>}, {transform_indices = @transform_2, window_bounds = array<i64: 8, 128>}, {transform_indices = @transform_3, window_bounds = array<i64: 8, 128>}]} {
    %c0 = arith.constant 0 : index
    %c0_0 = arith.constant 0 : index
    %0 = vector.load %arg2[%c0, %c0_0] : memref<8x128xf32, #tpu.memory_space<vmem>>, vector<8x128xf32>
    %1 = tpu.iota {dimensions = array<i32: 1>} : vector<1x128xi32>
    %cst = arith.constant 0.000000e+00 : f32
    %2 = vector.broadcast %cst : f32 to vector<8x128xf32>
    %cst_1 = arith.constant 5.000000e-01 : f32
    %3 = vector.broadcast %cst_1 : f32 to vector<8x128xf32>
    %4 = arith.mulf %0, %3 : vector<8x128xf32>
    %5 = arith.negf %4 : vector<8x128xf32>
    %6 = math.exp %5 : vector<8x128xf32>
    %cst_2 = arith.constant 1.000000e+00 : f32
    %7 = vector.broadcast %cst_2 : f32 to vector<8x128xf32>
    %8 = arith.addf %7, %6 : vector<8x128xf32>
    %9 = arith.divf %7, %8 : vector<8x128xf32>
    %c0_3 = arith.constant 0 : index
    %c0_4 = arith.constant 0 : index
    %10 = vector.load %arg1[%c0_3, %c0_4] : memref<128x128xf32, #tpu.memory_space<vmem>>, vector<128x128xf32>
    %cst_5 = arith.constant dense<0.000000e+00> : vector<8x128xf32>
    %11 = tpu.matmul %9, %10, %cst_5 {dimension_numbers = #tpu.dot_dimension_numbers<[1], [0], [0], [1], [0, 0, 1, 1], [], []>} : vector<8x128xf32>, vector<128x128xf32>, vector<8x128xf32> -> vector<8x128xf32>
    %12 = arith.addf %11, %0 : vector<8x128xf32>
    %13 = arith.subf %12, %0 : vector<8x128xf32>
    %14 = arith.mulf %13, %13 : vector<8x128xf32>
    %cst_6 = arith.constant dense<0.000000e+00> : vector<8xf32>
    %15 = vector.multi_reduction <add>, %14, %cst_6 [1] : vector<8x128xf32> to vector<8xf32>
    %16 = vector.shape_cast %15 : vector<8xf32> to vector<8x1xf32>
    %c0_i32 = arith.constant 0 : i32
    %17 = vector.broadcast %c0_i32 : i32 to vector<1x128xi32>
    %18 = arith.cmpi eq, %1, %17 : vector<1x128xi32>
    %19 = arith.extui %18 : vector<1x128xi1> to vector<1x128xi32>
    %20 = arith.sitofp %19 : vector<1x128xi32> to vector<1x128xf32>
    %21 = vector.broadcast %16 : vector<8x1xf32> to vector<8x128xf32>
    %22 = vector.broadcast %20 : vector<1x128xf32> to vector<8x128xf32>
    %23 = arith.mulf %21, %22 : vector<8x128xf32>
    %24 = arith.addf %2, %23 : vector<8x128xf32>
    %cst_7 = arith.constant 5.000000e-01 : f32
    %25 = vector.broadcast %cst_7 : f32 to vector<8x128xf32>
    %26 = arith.mulf %12, %25 : vector<8x128xf32>
    %27 = arith.negf %26 : vector<8x128xf32>
    %28 = math.exp %27 : vector<8x128xf32>
    %cst_8 = arith.constant 1.000000e+00 : f32
    %29 = vector.broadcast %cst_8 : f32 to vector<8x128xf32>
    %30 = arith.addf %29, %28 : vector<8x128xf32>
    %31 = arith.divf %29, %30 : vector<8x128xf32>
    %c0_9 = arith.constant 0 : index
    %c0_10 = arith.constant 0 : index
    %32 = vector.load %arg1[%c0_9, %c0_10] : memref<128x128xf32, #tpu.memory_space<vmem>>, vector<128x128xf32>
    %cst_11 = arith.constant dense<0.000000e+00> : vector<8x128xf32>
    %33 = tpu.matmul %31, %32, %cst_11 {dimension_numbers = #tpu.dot_dimension_numbers<[1], [0], [0], [1], [0, 0, 1, 1], [], []>} : vector<8x128xf32>, vector<128x128xf32>, vector<8x128xf32> -> vector<8x128xf32>
    %34 = arith.addf %33, %0 : vector<8x128xf32>
    %35 = arith.subf %34, %12 : vector<8x128xf32>
    %36 = arith.mulf %35, %35 : vector<8x128xf32>
    %cst_12 = arith.constant dense<0.000000e+00> : vector<8xf32>
    %37 = vector.multi_reduction <add>, %36, %cst_12 [1] : vector<8x128xf32> to vector<8xf32>
    %38 = vector.shape_cast %37 : vector<8xf32> to vector<8x1xf32>
    %c1_i32 = arith.constant 1 : i32
    %39 = vector.broadcast %c1_i32 : i32 to vector<1x128xi32>
    %40 = arith.cmpi eq, %1, %39 : vector<1x128xi32>
    %41 = arith.extui %40 : vector<1x128xi1> to vector<1x128xi32>
    %42 = arith.sitofp %41 : vector<1x128xi32> to vector<1x128xf32>
    %43 = vector.broadcast %38 : vector<8x1xf32> to vector<8x128xf32>
    %44 = vector.broadcast %42 : vector<1x128xf32> to vector<8x128xf32>
    %45 = arith.mulf %43, %44 : vector<8x128xf32>
    %46 = arith.addf %24, %45 : vector<8x128xf32>
    %cst_13 = arith.constant 5.000000e-01 : f32
    %47 = vector.broadcast %cst_13 : f32 to vector<8x128xf32>
    %48 = arith.mulf %34, %47 : vector<8x128xf32>
    %49 = arith.negf %48 : vector<8x128xf32>
    %50 = math.exp %49 : vector<8x128xf32>
    %cst_14 = arith.constant 1.000000e+00 : f32
    %51 = vector.broadcast %cst_14 : f32 to vector<8x128xf32>
    %52 = arith.addf %51, %50 : vector<8x128xf32>
    %53 = arith.divf %51, %52 : vector<8x128xf32>
    %c0_15 = arith.constant 0 : index
    %c0_16 = arith.constant 0 : index
    %54 = vector.load %arg1[%c0_15, %c0_16] : memref<128x128xf32, #tpu.memory_space<vmem>>, vector<128x128xf32>
    %cst_17 = arith.constant dense<0.000000e+00> : vector<8x128xf32>
    %55 = tpu.matmul %53, %54, %cst_17 {dimension_numbers = #tpu.dot_dimension_numbers<[1], [0], [0], [1], [0, 0, 1, 1], [], []>} : vector<8x128xf32>, vector<128x128xf32>, vector<8x128xf32> -> vector<8x128xf32>
    %56 = arith.addf %55, %0 : vector<8x128xf32>
    %57 = arith.subf %56, %34 : vector<8x128xf32>
    %58 = arith.mulf %57, %57 : vector<8x128xf32>
    %cst_18 = arith.constant dense<0.000000e+00> : vector<8xf32>
    %59 = vector.multi_reduction <add>, %58, %cst_18 [1] : vector<8x128xf32> to vector<8xf32>
    %60 = vector.shape_cast %59 : vector<8xf32> to vector<8x1xf32>
    %c2_i32 = arith.constant 2 : i32
    %61 = vector.broadcast %c2_i32 : i32 to vector<1x128xi32>
    %62 = arith.cmpi eq, %1, %61 : vector<1x128xi32>
    %63 = arith.extui %62 : vector<1x128xi1> to vector<1x128xi32>
    %64 = arith.sitofp %63 : vector<1x128xi32> to vector<1x128xf32>
    %65 = vector.broadcast %60 : vector<8x1xf32> to vector<8x128xf32>
    %66 = vector.broadcast %64 : vector<1x128xf32> to vector<8x128xf32>
    %67 = arith.mulf %65, %66 : vector<8x128xf32>
    %68 = arith.addf %46, %67 : vector<8x128xf32>
    %cst_19 = arith.constant 5.000000e-01 : f32
    %69 = vector.broadcast %cst_19 : f32 to vector<8x128xf32>
    %70 = arith.mulf %56, %69 : vector<8x128xf32>
    %71 = arith.negf %70 : vector<8x128xf32>
    %72 = math.exp %71 : vector<8x128xf32>
    %cst_20 = arith.constant 1.000000e+00 : f32
    %73 = vector.broadcast %cst_20 : f32 to vector<8x128xf32>
    %74 = arith.addf %73, %72 : vector<8x128xf32>
    %75 = arith.divf %73, %74 : vector<8x128xf32>
    %c0_21 = arith.constant 0 : index
    %c0_22 = arith.constant 0 : index
    %76 = vector.load %arg1[%c0_21, %c0_22] : memref<128x128xf32, #tpu.memory_space<vmem>>, vector<128x128xf32>
    %cst_23 = arith.constant dense<0.000000e+00> : vector<8x128xf32>
    %77 = tpu.matmul %75, %76, %cst_23 {dimension_numbers = #tpu.dot_dimension_numbers<[1], [0], [0], [1], [0, 0, 1, 1], [], []>} : vector<8x128xf32>, vector<128x128xf32>, vector<8x128xf32> -> vector<8x128xf32>
    %78 = arith.addf %77, %0 : vector<8x128xf32>
    %79 = arith.subf %78, %56 : vector<8x128xf32>
    %80 = arith.mulf %79, %79 : vector<8x128xf32>
    %cst_24 = arith.constant dense<0.000000e+00> : vector<8xf32>
    %81 = vector.multi_reduction <add>, %80, %cst_24 [1] : vector<8x128xf32> to vector<8xf32>
    %82 = vector.shape_cast %81 : vector<8xf32> to vector<8x1xf32>
    %c3_i32 = arith.constant 3 : i32
    %83 = vector.broadcast %c3_i32 : i32 to vector<1x128xi32>
    %84 = arith.cmpi eq, %1, %83 : vector<1x128xi32>
    %85 = arith.extui %84 : vector<1x128xi1> to vector<1x128xi32>
    %86 = arith.sitofp %85 : vector<1x128xi32> to vector<1x128xf32>
    %87 = vector.broadcast %82 : vector<8x1xf32> to vector<8x128xf32>
    %88 = vector.broadcast %86 : vector<1x128xf32> to vector<8x128xf32>
    %89 = arith.mulf %87, %88 : vector<8x128xf32>
    %90 = arith.addf %68, %89 : vector<8x128xf32>
    %cst_25 = arith.constant 5.000000e-01 : f32
    %91 = vector.broadcast %cst_25 : f32 to vector<8x128xf32>
    %92 = arith.mulf %78, %91 : vector<8x128xf32>
    %93 = arith.negf %92 : vector<8x128xf32>
    %94 = math.exp %93 : vector<8x128xf32>
    %cst_26 = arith.constant 1.000000e+00 : f32
    %95 = vector.broadcast %cst_26 : f32 to vector<8x128xf32>
    %96 = arith.addf %95, %94 : vector<8x128xf32>
    %97 = arith.divf %95, %96 : vector<8x128xf32>
    %c0_27 = arith.constant 0 : index
    %c0_28 = arith.constant 0 : index
    %98 = vector.load %arg1[%c0_27, %c0_28] : memref<128x128xf32, #tpu.memory_space<vmem>>, vector<128x128xf32>
    %cst_29 = arith.constant dense<0.000000e+00> : vector<8x128xf32>
    %99 = tpu.matmul %97, %98, %cst_29 {dimension_numbers = #tpu.dot_dimension_numbers<[1], [0], [0], [1], [0, 0, 1, 1], [], []>} : vector<8x128xf32>, vector<128x128xf32>, vector<8x128xf32> -> vector<8x128xf32>
    %100 = arith.addf %99, %0 : vector<8x128xf32>
    %101 = arith.subf %100, %78 : vector<8x128xf32>
    %102 = arith.mulf %101, %101 : vector<8x128xf32>
    %cst_30 = arith.constant dense<0.000000e+00> : vector<8xf32>
    %103 = vector.multi_reduction <add>, %102, %cst_30 [1] : vector<8x128xf32> to vector<8xf32>
    %104 = vector.shape_cast %103 : vector<8xf32> to vector<8x1xf32>
    %c4_i32 = arith.constant 4 : i32
    %105 = vector.broadcast %c4_i32 : i32 to vector<1x128xi32>
    %106 = arith.cmpi eq, %1, %105 : vector<1x128xi32>
    %107 = arith.extui %106 : vector<1x128xi1> to vector<1x128xi32>
    %108 = arith.sitofp %107 : vector<1x128xi32> to vector<1x128xf32>
    %109 = vector.broadcast %104 : vector<8x1xf32> to vector<8x128xf32>
    %110 = vector.broadcast %108 : vector<1x128xf32> to vector<8x128xf32>
    %111 = arith.mulf %109, %110 : vector<8x128xf32>
    %112 = arith.addf %90, %111 : vector<8x128xf32>
    %113 = tpu.iota {dimensions = array<i32: 1>} : vector<1x128xi32>
    %c48_i32 = arith.constant 48 : i32
    %114 = vector.broadcast %c48_i32 : i32 to vector<1x128xi32>
    %115 = arith.cmpi sge, %113, %114 : vector<1x128xi32>
    %c64_i32 = arith.constant 64 : i32
    %116 = vector.broadcast %c64_i32 : i32 to vector<1x128xi32>
    %117 = arith.cmpi slt, %113, %116 : vector<1x128xi32>
    %118 = arith.andi %115, %117 : vector<1x128xi1>
    %cst_31 = arith.constant 5.000000e-01 : f32
    %119 = vector.broadcast %cst_31 : f32 to vector<8x128xf32>
    %120 = arith.cmpf oge, %100, %119 : vector<8x128xf32>
    %cst_32 = arith.constant 1.000000e+00 : f32
    %cst_33 = arith.constant 0.000000e+00 : f32
    %121 = vector.broadcast %cst_32 : f32 to vector<8x128xf32>
    %122 = vector.broadcast %cst_33 : f32 to vector<8x128xf32>
    %123 = arith.select %120, %121, %122 : vector<8x128xi1>, vector<8x128xf32>
    %124 = vector.shape_cast %118 : vector<1x128xi1> to vector<1x128xi1>
    %125 = vector.broadcast %124 : vector<1x128xi1> to vector<8x128xi1>
    %126 = arith.select %125, %123, %100 : vector<8x128xi1>, vector<8x128xf32>
    %c0_34 = arith.constant 0 : index
    %c0_35 = arith.constant 0 : index
    %127 = vector.load %arg3[%c0_34, %c0_35] : memref<8x128xf32, #tpu.memory_space<vmem>>, vector<8x128xf32>
    tpu.vector_store %arg3[%c0_34, %c0_35], %126 {strides = array<i32>} : memref<8x128xf32, #tpu.memory_space<vmem>>, vector<8x128xf32>,
    %128 = arith.extui %118 : vector<1x128xi1> to vector<1x128xi32>
    %129 = arith.sitofp %128 : vector<1x128xi32> to vector<1x128xf32>
    %c48_i32_36 = arith.constant 48 : i32
    %130 = tpu.dynamic_rotate %0 by %c48_i32_36 dim 1 : vector<8x128xf32>, i32 -> vector<8x128xf32>
    %131 = arith.subf %123, %130 : vector<8x128xf32>
    %132 = math.absf %131 : vector<8x128xf32>
    %133 = vector.broadcast %129 : vector<1x128xf32> to vector<8x128xf32>
    %134 = arith.mulf %132, %133 : vector<8x128xf32>
    %cst_37 = arith.constant dense<0.000000e+00> : vector<8xf32>
    %135 = vector.multi_reduction <add>, %134, %cst_37 [1] : vector<8x128xf32> to vector<8xf32>
    %136 = vector.shape_cast %135 : vector<8xf32> to vector<8x1xf32>
    %cst_38 = arith.constant 6.250000e-02 : f32
    %137 = vector.broadcast %cst_38 : f32 to vector<8x1xf32>
    %138 = arith.mulf %136, %137 : vector<8x1xf32>
    %139 = math.sqrt %112 : vector<8x128xf32>
    %c5_i32 = arith.constant 5 : i32
    %140 = vector.broadcast %c5_i32 : i32 to vector<1x128xi32>
    %141 = arith.cmpi eq, %1, %140 : vector<1x128xi32>
    %142 = arith.extui %141 : vector<1x128xi1> to vector<1x128xi32>
    %143 = arith.sitofp %142 : vector<1x128xi32> to vector<1x128xf32>
    %144 = vector.broadcast %138 : vector<8x1xf32> to vector<8x128xf32>
    %145 = vector.broadcast %143 : vector<1x128xf32> to vector<8x128xf32>
    %146 = arith.mulf %144, %145 : vector<8x128xf32>
    %147 = arith.addf %139, %146 : vector<8x128xf32>
    %c0_39 = arith.constant 0 : index
    %c0_40 = arith.constant 0 : index
    %148 = vector.load %arg4[%c0_39, %c0_40] : memref<8x128xf32, #tpu.memory_space<vmem>>, vector<8x128xf32>
    tpu.vector_store %arg4[%c0_39, %c0_40], %147 {strides = array<i32>} : memref<8x128xf32, #tpu.memory_space<vmem>>, vector<8x128xf32>,
    return
  }
  func.func @transform_0(%arg0: i32) -> (i32, i32) {
    %c0_i32 = arith.constant 0 : i32
    %c0_i32_0 = arith.constant 0 : i32
    %c0_i32_1 = arith.constant 0 : i32
    return %c0_i32, %c0_i32_0 : i32, i32
  }
  func.func @transform_1(%arg0: i32) -> (i32, i32) {
    %c0_i32 = arith.constant 0 : i32
    %c0_i32_0 = arith.constant 0 : i32
    return %arg0, %c0_i32 : i32, i32
  }
  func.func @transform_2(%arg0: i32) -> (i32, i32) {
    %c0_i32 = arith.constant 0 : i32
    %c0_i32_0 = arith.constant 0 : i32
    return %arg0, %c0_i32 : i32, i32
  }
  func.func @transform_3(%arg0: i32) -> (i32, i32) {
    %c0_i32 = arith.constant 0 : i32
    %c0_i32_0 = arith.constant 0 : i32
    return %arg0, %c0_i32 : i32, i32
  }
}

</mosaic_0001>

<llo_original>
// kernel: tpu_custom_call.1
$region0: #{tpu_custom_call.1}
  #allocation0 [shape = 'u32[]', space=smem, size = 0x4, offset = 0x4, fixed_abs, tag = 'smem constant byte address 0x4 - core index']
  #allocation1 [shape = 'u32[72,128]{1,0:T(1,128)}', space=vmem, size = 0x9000, scoped, tag = 'internal scratch']
  %s0 = inlined_call_operand.hbm [shape: f32[128,128], index: 0, kind: input, shape index: {}]
  %s1 = inlined_call_operand.hbm [shape: f32[8,128], index: 1, kind: input, shape index: {}]
  %s2 = inlined_call_operand.hbm [shape: f32[8,128], index: 2, kind: output, shape index: {0}]
  %s3 = inlined_call_operand.hbm [shape: f32[8,128], index: 3, kind: output, shape index: {1}]
  %4 = xla_tuple %s2, %s3
  %s5 = sld [smem:[#allocation0]]
  $region34: #{tpu_custom_call.1} parent=0
    _
  %s7 = ssub.s32 1, %s5
  %s8 = scalar_select 0, %s7, %s5
  $region1: #{tpu_custom_call.1} parent=0
    #allocation2 [shape = 'u8[65536]{0}', space=vmem, size = 0x10000, scoped, tag = 'input window, operand 0, single buffered']
    #allocation3 [shape = 's32[1]{0}', space=sflag, size = 0x4, scoped, tag = 'scoped memory for tpu_custom_call.1']
    #allocation4 [shape = 's32[1]{0}', space=sflag, size = 0x4, scoped, tag = 'scoped memory for tpu_custom_call.1']
    #allocation5 [shape = 'u8[4096]{0}', space=vmem, size = 0x1000, scoped, tag = 'input window, operand 1, single buffered']
    #allocation6 [shape = 's32[1]{0}', space=sflag, size = 0x4, scoped, tag = 'scoped memory for tpu_custom_call.1']
    #allocation7 [shape = 'u8[4096]{0}', space=vmem, size = 0x1000, scoped, tag = 'output window, operand 0, single buffered']
    #allocation8 [shape = 'u8[4096]{0}', space=vmem, size = 0x1000, scoped, tag = 'output window, operand 1, single buffered']
    #allocation9 [shape = 's32[1]{0}', space=sflag, size = 0x4, scoped, tag = 'scoped memory for tpu_custom_call.1']
    %9 = vsyncpa [#allocation3], 0
    %10 = vsyncpa [#allocation6], 0
    %11 = vsyncpa [#allocation4], 0
    %12 = vsyncpa [#allocation9], 0
    // Predicated region
    $region2: #{tpu_custom_call.1} parent=1 // pred_check
      _
    $region3: #{tpu_custom_call.1} parent=1 // pred_check_branch
      %14 = sbr.rel (0) target = $region5
    $region4: #{tpu_custom_call.1} parent=1 // pred_region
      %16 = vsyncadd [#allocation3], 0
      %s17 = sshll.u32 %s0, 4
      %s18 = int_to_ptr.hbm [resolvable:$true] %s17
      %s19 = sshll.u32 [#allocation2], 4
      %s20 = int_to_ptr.vmem [resolvable:$true] %s19
      %25 = dma.hbm_to_vmem [thread:$0]  %s18, 2048, %s20, [#allocation3], 128, 128, 8
    $region5: #{tpu_custom_call.1} parent=1 // pred_fallthru
      _
    // Predicated region
    $region6: #{tpu_custom_call.1} parent=1 // pred_check
      _
    $region7: #{tpu_custom_call.1} parent=1 // pred_check_branch
      %27 = sbr.rel (0) target = $region9
    $region8: #{tpu_custom_call.1} parent=1 // pred_region
      %29 = vsyncadd [#allocation6], 0
      %s31 = sshll.u32 %s1, 4
      %s32 = int_to_ptr.hbm [resolvable:$true] %s31
      %s33 = sshll.u32 [#allocation5], 4
      %s34 = int_to_ptr.vmem [resolvable:$true] %s33
      %36 = dma.hbm_to_vmem [thread:$0]  %s32, 128, %s34, [#allocation6]
    $region9: #{tpu_custom_call.1} parent=1 // pred_fallthru
      _
    // Predicated region
    $region10: #{tpu_custom_call.1} parent=1 // pred_check
      _
    $region11: #{tpu_custom_call.1} parent=1 // pred_check_branch
      %38 = sbr.rel (0) target = $region13
    $region12: #{tpu_custom_call.1} parent=1 // pred_region
      %40 = dma.done [#allocation3], 2048
    $region13: #{tpu_custom_call.1} parent=1 // pred_fallthru
      _
    // Predicated region
    $region14: #{tpu_custom_call.1} parent=1 // pred_check
      _
    $region15: #{tpu_custom_call.1} parent=1 // pred_check_branch
      %42 = sbr.rel (0) target = $region17
    $region16: #{tpu_custom_call.1} parent=1 // pred_region
      %44 = dma.done [#allocation6], 128
    $region17: #{tpu_custom_call.1} parent=1 // pred_fallthru
      _
    %v45 = vld [vmem:[#allocation5] sm:$0xff]
    %v46 = vlaneseq
    %v47 = vand.u32 %v46, 127
    %v48 = vmul.f32 %v45, 0.5
    %v49 = vxor.u32 %v48, 2147483648
    %v50 = vmul.f32 %v49, 1.442695
    %v51 = vpow.pop %v50
    %v52 = vadd.f32 %v51, 1.0
    %v53 = vrcp.pop %v52
    %v54 = vmul.f32 %v52, %v53
    %v55 = vsub.f32 1.0, %v54
    %v56 = vmul.f32 %v53, %v55
    %v57 = vadd.f32 %v53, %v56
    %vm58 = vweird.f32 %v52
    %vm59 = vweird.f32 %v53
    %vm60 = vmor %vm58, %vm59
    %v61 = vsel %vm60, %v53, %v57
    %v62 = vand.u32 2147483647, %v52
    %vm63 = vcmp.eq.f32.partialorder %v62, 8.507059e+37
    %v64 = vand.u32 %v52, 2147483648
    %v65 = vor.u32 1.1754944e-38, %v64
    %v66 = vsel %vm63, %v65, %v61
    %v67 = vmul.f32 1.0, %v66
    %v68 = vld [vmem:[#allocation2] sm:$0xff]
    %v69 = vld [vmem:[#allocation2 + $0x8] sm:$0xff]
    %v70 = vld [vmem:[#allocation2 + $0x10] sm:$0xff]
    %v71 = vld [vmem:[#allocation2 + $0x18] sm:$0xff]
    %v72 = vld [vmem:[#allocation2 + $0x20] sm:$0xff]
    %v73 = vld [vmem:[#allocation2 + $0x28] sm:$0xff]
    %v74 = vld [vmem:[#allocation2 + $0x30] sm:$0xff]
    %v75 = vld [vmem:[#allocation2 + $0x38] sm:$0xff]
    %v76 = vld [vmem:[#allocation2 + $0x40] sm:$0xff]
    %v77 = vld [vmem:[#allocation2 + $0x48] sm:$0xff]
    %v78 = vld [vmem:[#allocation2 + $0x50] sm:$0xff]
    %v79 = vld [vmem:[#allocation2 + $0x58] sm:$0xff]
    %v80 = vld [vmem:[#allocation2 + $0x60] sm:$0xff]
    %v81 = vld [vmem:[#allocation2 + $0x68] sm:$0xff]
    %v82 = vld [vmem:[#allocation2 + $0x70] sm:$0xff]
    %v83 = vld [vmem:[#allocation2 + $0x78] sm:$0xff]
    %84 = vmatpush.msra.mxu0 %v83
    %85 = vmatpush.msra.mxu0 %v82
    %86 = vmatpush.msra.mxu0 %v81
    %87 = vmatpush.msra.mxu0 %v80
    %88 = vmatpush.msra.mxu0 %v79
    %89 = vmatpush.msra.mxu0 %v78
    %90 = vmatpush.msra.mxu0 %v77
    %91 = vmatpush.msra.mxu0 %v76
    %92 = vmatpush.msra.mxu0 %v75
    %93 = vmatpush.msra.mxu0 %v74
    %94 = vmatpush.msra.mxu0 %v73
    %95 = vmatpush.msra.mxu0 %v72
    %96 = vmatpush.msra.mxu0 %v71
    %97 = vmatpush.msra.mxu0 %v70
    %98 = vmatpush.msra.mxu0 %v69
    %99 = vmatpush.msra.mxu0 %v68
    %100 = vmatmul.f32.gmra.mxu0 %v67
    %v101 = vpop.f32.mrf.mxu0
    %v102 = vadd.f32 %v45, %v101
    %103 = vdwg.mxu0
    %v104 = vsub.f32 %v102, %v45
    %v105 = vmul.f32 %v104, %v104
    %106 = vadd.xlane.f32.xlu0 %v105
    %v107 = vpop.xlane.xlu0 %106
    %vm108 = vcmp.eq.s32.totalorder %v47, 0
    %v109 = vsel %vm108, 1, 0
    %v110 = vcvt.s32.f32 %v109
    %v111 = vmul.f32 %v107, %v110
    %v112 = vadd.f32 %v111, 0.0
    %v113 = vmul.f32 %v102, 0.5
    %v114 = vxor.u32 %v113, 2147483648
    %v115 = vmul.f32 %v114, 1.442695
    %v116 = vpow.pop %v115
    %v117 = vadd.f32 %v116, 1.0
    %v118 = vrcp.pop %v117
    %v119 = vmul.f32 %v117, %v118
    %v120 = vsub.f32 1.0, %v119
    %v121 = vmul.f32 %v118, %v120
    %v122 = vadd.f32 %v118, %v121
    %vm123 = vweird.f32 %v117
    %vm124 = vweird.f32 %v118
    %vm125 = vmor %vm123, %vm124
    %v126 = vsel %vm125, %v118, %v122
    %v127 = vand.u32 2147483647, %v117
    %vm128 = vcmp.eq.f32.partialorder %v127, 8.507059e+37
    %v129 = vand.u32 %v117, 2147483648
    %v130 = vor.u32 1.1754944e-38, %v129
    %v131 = vsel %vm128, %v130, %v126
    %v132 = vmul.f32 1.0, %v131
    %133 = vmatpush.msra.mxu0 %v83
    %134 = vmatpush.msra.mxu0 %v82
    %135 = vmatpush.msra.mxu0 %v81
    %136 = vmatpush.msra.mxu0 %v80
    %137 = vmatpush.msra.mxu0 %v79
    %138 = vmatpush.msra.mxu0 %v78
    %139 = vmatpush.msra.mxu0 %v77
    %140 = vmatpush.msra.mxu0 %v76
    %141 = vmatpush.msra.mxu0 %v75
    %142 = vmatpush.msra.mxu0 %v74
    %143 = vmatpush.msra.mxu0 %v73
    %144 = vmatpush.msra.mxu0 %v72
    %145 = vmatpush.msra.mxu0 %v71
    %146 = vmatpush.msra.mxu0 %v70
    %147 = vmatpush.msra.mxu0 %v69
    %148 = vmatpush.msra.mxu0 %v68
    %149 = vmatmul.f32.gmra.mxu0 %v132
    %v150 = vpop.f32.mrf.mxu0
    %v151 = vadd.f32 %v45, %v150
    %152 = vdwg.mxu0
    %v153 = vsub.f32 %v151, %v102
    %v154 = vmul.f32 %v153, %v153
    %155 = vadd.xlane.f32.xlu0 %v154
    %v156 = vpop.xlane.xlu0 %155
    %vm157 = vcmp.eq.s32.totalorder %v47, 1
    %v158 = vsel %vm157, 1, 0
    %v159 = vcvt.s32.f32 %v158
    %v160 = vmul.f32 %v156, %v159
    %v161 = vadd.f32 %v112, %v160
    %v162 = vmul.f32 %v151, 0.5
    %v163 = vxor.u32 %v162, 2147483648
    %v164 = vmul.f32 %v163, 1.442695
    %v165 = vpow.pop %v164
    %v166 = vadd.f32 %v165, 1.0
    %v167 = vrcp.pop %v166
    %v168 = vmul.f32 %v166, %v167
    %v169 = vsub.f32 1.0, %v168
    %v170 = vmul.f32 %v167, %v169
    %v171 = vadd.f32 %v167, %v170
    %vm172 = vweird.f32 %v166
    %vm173 = vweird.f32 %v167
    %vm174 = vmor %vm172, %vm173
    %v175 = vsel %vm174, %v167, %v171
    %v176 = vand.u32 2147483647, %v166
    %vm177 = vcmp.eq.f32.partialorder %v176, 8.507059e+37
    %v178 = vand.u32 %v166, 2147483648
    %v179 = vor.u32 1.1754944e-38, %v178
    %v180 = vsel %vm177, %v179, %v175
    %v181 = vmul.f32 1.0, %v180
    %182 = vmatpush.msra.mxu0 %v83
    %183 = vmatpush.msra.mxu0 %v82
    %184 = vmatpush.msra.mxu0 %v81
    %185 = vmatpush.msra.mxu0 %v80
    %186 = vmatpush.msra.mxu0 %v79
    %187 = vmatpush.msra.mxu0 %v78
    %188 = vmatpush.msra.mxu0 %v77
    %189 = vmatpush.msra.mxu0 %v76
    %190 = vmatpush.msra.mxu0 %v75
    %191 = vmatpush.msra.mxu0 %v74
    %192 = vmatpush.msra.mxu0 %v73
    %193 = vmatpush.msra.mxu0 %v72
    %194 = vmatpush.msra.mxu0 %v71
    %195 = vmatpush.msra.mxu0 %v70
    %196 = vmatpush.msra.mxu0 %v69
    %197 = vmatpush.msra.mxu0 %v68
    %198 = vmatmul.f32.gmra.mxu0 %v181
    %v199 = vpop.f32.mrf.mxu0
    %v200 = vadd.f32 %v45, %v199
    %201 = vdwg.mxu0
    %v202 = vsub.f32 %v200, %v151
    %v203 = vmul.f32 %v202, %v202
    %204 = vadd.xlane.f32.xlu0 %v203
    %v205 = vpop.xlane.xlu0 %204
    %vm206 = vcmp.eq.s32.totalorder %v47, 2
    %v207 = vsel %vm206, 1, 0
    %v208 = vcvt.s32.f32 %v207
    %v209 = vmul.f32 %v205, %v208
    %v210 = vadd.f32 %v161, %v209
    %v211 = vmul.f32 %v200, 0.5
    %v212 = vxor.u32 %v211, 2147483648
    %v213 = vmul.f32 %v212, 1.442695
    %v214 = vpow.pop %v213
    %v215 = vadd.f32 %v214, 1.0
    %v216 = vrcp.pop %v215
    %v217 = vmul.f32 %v215, %v216
    %v218 = vsub.f32 1.0, %v217
    %v219 = vmul.f32 %v216, %v218
    %v220 = vadd.f32 %v216, %v219
    %vm221 = vweird.f32 %v215
    %vm222 = vweird.f32 %v216
    %vm223 = vmor %vm221, %vm222
    %v224 = vsel %vm223, %v216, %v220
    %v225 = vand.u32 2147483647, %v215
    %vm226 = vcmp.eq.f32.partialorder %v225, 8.507059e+37
    %v227 = vand.u32 %v215, 2147483648
    %v228 = vor.u32 1.1754944e-38, %v227
    %v229 = vsel %vm226, %v228, %v224
    %v230 = vmul.f32 1.0, %v229
    %231 = vmatpush.msra.mxu0 %v83
    %232 = vmatpush.msra.mxu0 %v82
    %233 = vmatpush.msra.mxu0 %v81
    %234 = vmatpush.msra.mxu0 %v80
    %235 = vmatpush.msra.mxu0 %v79
    %236 = vmatpush.msra.mxu0 %v78
    %237 = vmatpush.msra.mxu0 %v77
    %238 = vmatpush.msra.mxu0 %v76
    %239 = vmatpush.msra.mxu0 %v75
    %240 = vmatpush.msra.mxu0 %v74
    %241 = vmatpush.msra.mxu0 %v73
    %242 = vmatpush.msra.mxu0 %v72
    %243 = vmatpush.msra.mxu0 %v71
    %244 = vmatpush.msra.mxu0 %v70
    %245 = vmatpush.msra.mxu0 %v69
    %246 = vmatpush.msra.mxu0 %v68
    %247 = vmatmul.f32.gmra.mxu0 %v230
    %v248 = vpop.f32.mrf.mxu0
    %v249 = vadd.f32 %v45, %v248
    %250 = vdwg.mxu0
    %v251 = vsub.f32 %v249, %v200
    %v252 = vmul.f32 %v251, %v251
    %253 = vadd.xlane.f32.xlu0 %v252
    %v254 = vpop.xlane.xlu0 %253
    %vm255 = vcmp.eq.s32.totalorder %v47, 3
    %v256 = vsel %vm255, 1, 0
    %v257 = vcvt.s32.f32 %v256
    %v258 = vmul.f32 %v254, %v257
    %v259 = vadd.f32 %v210, %v258
    %v260 = vmul.f32 %v249, 0.5
    %v261 = vxor.u32 %v260, 2147483648
    %v262 = vmul.f32 %v261, 1.442695
    %v263 = vpow.pop %v262
    %v264 = vadd.f32 %v263, 1.0
    %v265 = vrcp.pop %v264
    %v266 = vmul.f32 %v264, %v265
    %v267 = vsub.f32 1.0, %v266
    %v268 = vmul.f32 %v265, %v267
    %v269 = vadd.f32 %v265, %v268
    %vm270 = vweird.f32 %v264
    %vm271 = vweird.f32 %v265
    %vm272 = vmor %vm270, %vm271
    %v273 = vsel %vm272, %v265, %v269
    %v274 = vand.u32 2147483647, %v264
    %vm275 = vcmp.eq.f32.partialorder %v274, 8.507059e+37
    %v276 = vand.u32 %v264, 2147483648
    %v277 = vor.u32 1.1754944e-38, %v276
    %v278 = vsel %vm275, %v277, %v273
    %v279 = vmul.f32 1.0, %v278
    %280 = vmatpush.msra.mxu0 %v83
    %281 = vmatpush.msra.mxu0 %v82
    %282 = vmatpush.msra.mxu0 %v81
    %283 = vmatpush.msra.mxu0 %v80
    %284 = vmatpush.msra.mxu0 %v79
    %285 = vmatpush.msra.mxu0 %v78
    %286 = vmatpush.msra.mxu0 %v77
    %287 = vmatpush.msra.mxu0 %v76
    %288 = vmatpush.msra.mxu0 %v75
    %289 = vmatpush.msra.mxu0 %v74
    %290 = vmatpush.msra.mxu0 %v73
    %291 = vmatpush.msra.mxu0 %v72
    %292 = vmatpush.msra.mxu0 %v71
    %293 = vmatpush.msra.mxu0 %v70
    %294 = vmatpush.msra.mxu0 %v69
    %295 = vmatpush.msra.mxu0 %v68
    %296 = vmatmul.f32.gmra.mxu0 %v279
    %v297 = vpop.f32.mrf.mxu0
    %v298 = vadd.f32 %v45, %v297
    %299 = vdwg.mxu0
    %v300 = vsub.f32 %v298, %v249
    %v301 = vmul.f32 %v300, %v300
    %302 = vadd.xlane.f32.xlu0 %v301
    %v303 = vpop.xlane.xlu0 %302
    %vm304 = vcmp.eq.s32.totalorder %v47, 4
    %v305 = vsel %vm304, 1, 0
    %v306 = vcvt.s32.f32 %v305
    %v307 = vmul.f32 %v303, %v306
    %v308 = vadd.f32 %v259, %v307
    %vm309 = vcmp.ge.s32.totalorder %v47, 48
    %vm310 = vcmp.lt.s32.totalorder %v47, 64
    %vm311 = vmand %vm309, %vm310
    %vm312 = vcmp.ge.f32.partialorder %v298, 0.5
    %v313 = vsel %vm312, 1.0, 0.0
    %v314 = vsel %vm311, 1, 0
    %vm315 = vcmp.eq.s32.totalorder %v314, 1
    %v316 = vsel %vm315, %v313, %v298
    %317 = vst [vmem:[#allocation7] sm:$0xff] %v316
    %v318 = vcvt.s32.f32 %v314
    %319 = vrot.lane.b32.xlu0 %v45, 48
    %v320 = vpop.permute.xlu0 %319
    %v321 = vsub.f32 %v313, %v320
    %v322 = vand.u32 2147483647, %v321
    %v323 = vmul.f32 %v322, %v318
    %324 = vadd.xlane.f32.xlu0 %v323
    %v325 = vpop.xlane.xlu0 %324
    %v326 = vmul.f32 %v325, 0.0625
    %v327 = vrsqrt.pop %v308
    %v328 = vmul.f32 %v327, %v308
    %v329 = vmul.f32 %v328, %v327
    %v330 = vmul.f32 0.5, %v329
    %v331 = vsub.f32 1.5, %v330
    %v332 = vmul.f32 %v327, %v331
    %v333 = vmul.f32 %v308, %v332
    %vm334 = vcmp.eq.f32.partialorder %v308, inf
    %v335 = vsel %vm334, %v308, %v333
    %vm336 = vcmp.eq.f32.partialorder %v308, 0.0
    %v337 = vand.u32 %v308, 2147483648
    %v338 = vsel %vm336, %v337, %v335
    %vm339 = vcmp.eq.s32.totalorder %v47, 5
    %v340 = vsel %vm339, 1, 0
    %v341 = vcvt.s32.f32 %v340
    %v342 = vmul.f32 %v326, %v341
    %v343 = vadd.f32 %v338, %v342
    %344 = vst [vmem:[#allocation8] sm:$0xff] %v343
    // Predicated region
    $region18: #{tpu_custom_call.1} parent=1 // pred_check
      _
    $region19: #{tpu_custom_call.1} parent=1 // pred_check_branch
      %346 = sbr.rel (0) target = $region21
    $region20: #{tpu_custom_call.1} parent=1 // pred_region
      %348 = vsyncadd [#allocation4], 0
      %s350 = sshll.u32 [#allocation7], 4
      %s351 = int_to_ptr.vmem [resolvable:$true] %s350
      %s352 = sshll.u32 %s2, 4
      %s353 = int_to_ptr.hbm [resolvable:$true] %s352
      %355 = dma.vmem_to_hbm [thread:$0]  %s351, 128, %s353, [#allocation4]
    $region21: #{tpu_custom_call.1} parent=1 // pred_fallthru
      _
    // Predicated region
    $region22: #{tpu_custom_call.1} parent=1 // pred_check
      _
    $region23: #{tpu_custom_call.1} parent=1 // pred_check_branch
      %357 = sbr.rel (0) target = $region25
    $region24: #{tpu_custom_call.1} parent=1 // pred_region
      %359 = vsyncadd [#allocation9], 0
      %s361 = sshll.u32 [#allocation8], 4
      %s362 = int_to_ptr.vmem [resolvable:$true] %s361
      %s363 = sshll.u32 %s3, 4
      %s364 = int_to_ptr.hbm [resolvable:$true] %s363
      %366 = dma.vmem_to_hbm [thread:$0]  %s362, 128, %s364, [#allocation9]
    $region25: #{tpu_custom_call.1} parent=1 // pred_fallthru
      _
    // Predicated region
    $region26: #{tpu_custom_call.1} parent=1 // pred_check
      _
    $region27: #{tpu_custom_call.1} parent=1 // pred_check_branch
      %368 = sbr.rel (0) target = $region29
    $region28: #{tpu_custom_call.1} parent=1 // pred_region
      %370 = dma.done [#allocation4], 128
    $region29: #{tpu_custom_call.1} parent=1 // pred_fallthru
      _
    // Predicated region
    $region30: #{tpu_custom_call.1} parent=1 // pred_check
      _
    $region31: #{tpu_custom_call.1} parent=1 // pred_check_branch
      %372 = sbr.rel (0) target = $region33
    $region32: #{tpu_custom_call.1} parent=1 // pred_region
      %374 = dma.done [#allocation9], 128
    $region33: #{tpu_custom_call.1} parent=1 // pred_fallthru
      _
    %375 = vsyncpa [#allocation3], 1
    %376 = vsyncpa [#allocation6], 1
    %377 = vsyncpa [#allocation4], 1
    %378 = vsyncpa [#allocation9], 1

</llo_original>
